<compile_context>
chip_gen: v6e
topology: v6e:2x2x1
jax: 0.10.0
libtpu: 0.0.40
codegen_flags: <defaults>
</compile_context>

<pallas_src>
import math
from functools import partial

import jax
import jax.numpy as jnp
from jax.experimental import pallas as pl
from jax.experimental.pallas import tpu as pltpu


def _round_up(a, m):
    return ((a + m - 1) // m) * m


def _pick_tile_n(n, sub, max_tile=256):
    """Row-tile size (multiple of `sub`, <= max_tile) minimizing N padding; at equal
    padding prefer the largest tile (fewer grid steps, less weight re-streaming)."""
    best_t = sub
    best_pad = _round_up(n, sub) - n
    t = sub
    while t + sub <= max_tile:
        t += sub
        pad = _round_up(n, t) - n
        if pad <= best_pad:
            best_t, best_pad = t, pad
    return best_t


# ---------------------------------------------------------------------------
# Kernels
# ---------------------------------------------------------------------------

def _dense_lora_kernel(x_ref, wt_ref, b_ref, ae_ref, bt_ref, o_ref,
                       acc_ref, mid_ref, *, weight_gain):
    # x: (tn, tk)  wt: (tk, t_out)  b: (1, t_out)  ae: (tk, r)  bt: (r, t_out)
    k = pl.program_id(2)
    nk = pl.num_programs(2)

    @pl.when(k == 0)
    def _():
        acc_ref[...] = jnp.zeros_like(acc_ref)
        mid_ref[...] = jnp.zeros_like(mid_ref)

    x = x_ref[...]
    # Base GEMM: bf16 (or f32) MXU operands, f32 accumulation in VMEM scratch.
    acc_ref[...] += jnp.dot(x, wt_ref[...], preferred_element_type=jnp.float32)
    # Low-rank mid (tn, r): E and the lora scaling are pre-folded into ae in the
    # wrapper.  Recomputed per out-tile (~r/tile_out extra MXU work) instead of being
    # hoisted across j, so both row/out grid axes stay safely megacore-'parallel'.
    mid_ref[...] += jnp.dot(x, ae_ref[...], preferred_element_type=jnp.float32)

    @pl.when(k == nk - 1)
    def _():
        lora = jnp.dot(mid_ref[...].astype(bt_ref.dtype), bt_ref[...],
                       preferred_element_type=jnp.float32)
        # Epilogue stays f32 (v5e has no native bf16 VPU); bias_gain pre-folded into b.
        o_ref[...] = (acc_ref[...] * weight_gain + b_ref[...] + lora).astype(o_ref.dtype)


def _dense_kernel(x_ref, wt_ref, b_ref, o_ref, acc_ref, *, weight_gain):
    # Plain GEMM + bias (folded-LoRA path and zero_conv 1x1 path).
    k = pl.program_id(2)
    nk = pl.num_programs(2)

    @pl.when(k == 0)
    def _():
        acc_ref[...] = jnp.zeros_like(acc_ref)

    acc_ref[...] += jnp.dot(x_ref[...], wt_ref[...],
                            preferred_element_type=jnp.float32)

    @pl.when(k == nk - 1)
    def _():
        o_ref[...] = (acc_ref[...] * weight_gain + b_ref[...]).astype(o_ref.dtype)


# ---------------------------------------------------------------------------
# One-time parameter preparation (cache the returned dict across forward calls)
# ---------------------------------------------------------------------------

def _prepare_dense(w_t, bias_row, a_e, b_t, *, weight_gain, param_dtype,
                   tile_out=None, tile_k=None):
    """w_t: (in, out) f32; bias_row: (1, out) f32 (gains already folded);
    a_e: (in, r) f32 with E and lora scaling folded, or None; b_t: (r, out) or None."""
    in_features, out_features = w_t.shape

    # Lane-dense output: pad out to a multiple of 128 (unmasked vst).
    out_pad = _round_up(out_features, 128)
    if tile_out is None:
        # 256 fills the v6e/v7x 2x256^2 MXU; pass tile_out=128 explicitly on v5e.
        tile_out = 256 if out_pad % 256 == 0 else 128
    if out_pad % tile_out != 0:
        tile_out = 128

    # K tiling: full K for small in_features, otherwise 512-wide K tiles so VMEM per
    # grid step is bounded independent of in_features.
    if tile_k is None:
        tile_k = in_features if in_features <= 1024 else 512
    if tile_k >= in_features:
        tile_k = in_features
        in_pad = in_features
    else:
        tile_k = _round_up(tile_k, 128)
        in_pad = _round_up(in_features, tile_k)

    w_t = w_t.astype(jnp.float32)
    bias_row = bias_row.astype(jnp.float32)
    po = out_pad - out_features
    pi = in_pad - in_features
    if po:
        w_t = jnp.pad(w_t, ((0, 0), (0, po)))
        bias_row = jnp.pad(bias_row, ((0, 0), (0, po)))
    if pi:
        w_t = jnp.pad(w_t, ((0, pi), (0, 0)))

    params = dict(
        w_t=w_t.astype(param_dtype),
        bias_row=bias_row,                     # bias stays f32 (f32 epilogue)
        a_e=None, b_t=None, r=0,
        weight_gain=float(weight_gain),
        in_features=in_features, out_features=out_features,
        in_pad=in_pad, out_pad=out_pad,
        tile_out=tile_out, tile_k=tile_k,
    )
    if a_e is not None:
        r = a_e.shape[1]
        a_e = a_e.astype(jnp.float32)
        b_t = b_t.astype(jnp.float32)
        if pi:
            a_e = jnp.pad(a_e, ((0, pi), (0, 0)))
        if po:
            b_t = jnp.pad(b_t, ((0, 0), (0, po)))
        params.update(a_e=a_e.astype(param_dtype),
                      b_t=b_t.astype(param_dtype), r=r)
    return params


def prepare_ada_fc_params(weight, bias, lora_A, lora_B, lora_E, *,
                          lr_multiplier=1.0, lora_alpha=1, r=4,
                          fold_lora=False, param_dtype=jnp.bfloat16,
                          tile_out=None, tile_k=None):
    """One-time prep for the LoRA-adapted FC layer.  Cache the result across calls.
    fold_lora=True folds the rank-r update into an effective weight (single-GEMM
    path) — only worth it when that folded weight is reused across many calls."""
    out_features, in_features = weight.shape
    weight_gain = float(lr_multiplier) / math.sqrt(in_features)
    bias_gain = float(lr_multiplier)
    scaling = float(lora_alpha) if lora_alpha > 0 else float(r)
    lora_scale = scaling / (float(r) + 1e-5)

    w_t = weight.T.astype(jnp.float32)                                   # (in, out)
    e_row = jnp.reshape(lora_E, (1, r)).astype(jnp.float32)
    a_e = lora_A.T.astype(jnp.float32) * e_row * lora_scale              # (in, r)
    b_t = lora_B.T.astype(jnp.float32)                                   # (r, out)
    bias_row = bias.reshape(1, out_features).astype(jnp.float32) * bias_gain

    if fold_lora:
        w_eff = weight_gain * w_t + a_e @ b_t
        return _prepare_dense(w_eff, bias_row, None, None, weight_gain=1.0,
                              param_dtype=param_dtype, tile_out=tile_out, tile_k=tile_k)
    return _prepare_dense(w_t, bias_row, a_e, b_t, weight_gain=weight_gain,
                          param_dtype=param_dtype, tile_out=tile_out, tile_k=tile_k)


def prepare_zero_conv_params(weight, bias, *, param_dtype=jnp.bfloat16,
                             tile_out=None, tile_k=None):
    """ControlNet zero_conv 1x1: weight (C_out, C_in, 1, 1) or (C_out, C_in)."""
    c_out = weight.shape[0]
    w2d = weight.reshape(c_out, -1).astype(jnp.float32)                  # (C_out, C_in)
    return _prepare_dense(w2d.T, bias.reshape(1, c_out).astype(jnp.float32),
                          None, None, weight_gain=1.0, param_dtype=param_dtype,
                          tile_out=tile_out, tile_k=tile_k)


# ---------------------------------------------------------------------------
# Forward
# ---------------------------------------------------------------------------

def dense_forward(x, params, *, tile_n=None):
    """x: (N, in_features) -> (N, out_features), in x.dtype."""
    N, in_features = x.shape
    assert in_features == params["in_features"]
    in_pad, out_pad = params["in_pad"], params["out_pad"]
    out_features = params["out_features"]
    tile_out, tile_k = params["tile_out"], params["tile_k"]
    w_t, bias_row = params["w_t"], params["bias_row"]
    a_e, b_t, r = params["a_e"], params["b_t"], params["r"]

    compute_dtype = w_t.dtype
    sub = 16 if compute_dtype == jnp.bfloat16 else 8
    if tile_n is None:
        tile_n = _pick_tile_n(N, sub)
    n_pad = _round_up(N, tile_n)

    # v7x megacore: make sure tiny problems still expose >= 2 'parallel' tiles.
    if (n_pad // tile_n) * (out_pad // tile_out) < 2 and out_pad >= 256:
        tile_out = 128

    x_c = x.astype(compute_dtype)
    if n_pad != N or in_pad != in_features:
        x_c = jnp.pad(x_c, ((0, n_pad - N), (0, in_pad - in_features)))

    grid = (n_pad // tile_n, out_pad // tile_out, in_pad // tile_k)
    cparams = pltpu.CompilerParams(
        dimension_semantics=("parallel", "parallel", "arbitrary"),
        vmem_limit_bytes=48 * 1024 * 1024,   # headroom below v7x's 64 MiB physical VMEM
    )
    out_shape = jax.ShapeDtypeStruct((n_pad, out_pad), x.dtype)

    x_spec = pl.BlockSpec((tile_n, tile_k), lambda i, j, k: (i, k))
    w_spec = pl.BlockSpec((tile_k, tile_out), lambda i, j, k: (k, j))
    bias_spec = pl.BlockSpec((1, tile_out), lambda i, j, k: (0, j))
    o_spec = pl.BlockSpec((tile_n, tile_out), lambda i, j, k: (i, j))
    acc_scratch = pltpu.VMEM((tile_n, tile_out), jnp.float32)

    if a_e is None:
        out = pl.pallas_call(
            partial(_dense_kernel, weight_gain=params["weight_gain"]),
            out_shape=out_shape,
            grid=grid,
            in_specs=[x_spec, w_spec, bias_spec],
            out_specs=o_spec,
            scratch_shapes=[acc_scratch],
            compiler_params=cparams,
        )(x_c, w_t, bias_row)
    else:
        ae_spec = pl.BlockSpec((tile_k, r), lambda i, j, k: (k, 0))
        bt_spec = pl.BlockSpec((r, tile_out), lambda i, j, k: (0, j))
        out = pl.pallas_call(
            partial(_dense_lora_kernel, weight_gain=params["weight_gain"]),
            out_shape=out_shape,
            grid=grid,
            in_specs=[x_spec, w_spec, bias_spec, ae_spec, bt_spec],
            out_specs=o_spec,
            scratch_shapes=[acc_scratch, pltpu.VMEM((tile_n, r), jnp.float32)],
            compiler_params=cparams,
        )(x_c, w_t, bias_row, a_e, b_t)

    return out[:N, :out_features]


def ada_fully_connected(x, weight, bias, lora_A, lora_B, lora_E, *,
                        lr_multiplier=1.0, lora_alpha=1, r=4,
                        fold_lora=False, param_dtype=jnp.bfloat16, params=None):
    """Convenience wrapper.  For repeated calls, build `params` once with
    prepare_ada_fc_params and pass it in (avoids re-transposing/padding the weight)."""
    if params is None:
        params = prepare_ada_fc_params(
            weight, bias, lora_A, lora_B, lora_E, lr_multiplier=lr_multiplier,
            lora_alpha=lora_alpha, r=r, fold_lora=fold_lora, param_dtype=param_dtype)
    return dense_forward(x, params)


def zero_conv1x1(x_nchw, params):
    """ControlNet zero-init 1x1 conv: NCHW -> NCHW pointwise channel mixing."""
    N, C, H, W = x_nchw.shape
    assert C == params["in_features"]
    c_out = params["out_features"]
    x2d = jnp.transpose(x_nchw, (0, 2, 3, 1)).reshape(N * H * W, C)
    y2d = dense_forward(x2d, params)
    return jnp.transpose(y2d.reshape(N, H, W, c_out), (0, 3, 1, 2))


# ---------------------------------------------------------------------------
# References & self-test
# ---------------------------------------------------------------------------

def _dot_hp(a, b):
    return jnp.dot(a, b, precision=jax.lax.Precision.HIGHEST)


def _reference_fc(x, weight, bias, lora_A, lora_B, lora_E,
                  *, lr_multiplier=1.0, lora_alpha=1, r=4):
    weight_gain = lr_multiplier / math.sqrt(x.shape[1])
    scaling = float(lora_alpha) if lora_alpha > 0 else float(r)
    w = weight * weight_gain
    b = bias * lr_multiplier
    out = _dot_hp(x, w.T) + b[None, :]
    out = out + _dot_hp(_dot_hp(x, (lora_A * lora_E).T), lora_B.T) * scaling / (float(r) + 1e-5)
    return out


def _reference_zero_conv(x, weight, bias):
    w2d = weight.reshape(weight.shape[0], -1)
    y = jnp.einsum('nchw,oc->nohw', x, w2d, precision=jax.lax.Precision.HIGHEST)
    return y + bias[None, :, None, None]


if __name__ == "__main__":
    key = jax.random.PRNGKey(0)
    keys = jax.random.split(key, 16)

    # ---- LoRA-adapted FC layer (small shapes) ----
    N, in_f, out_f, r = 8, 32, 32, 4
    lora_alpha, lr_mult = 1, 1.0
    x = jax.random.normal(keys[0], (N, in_f), dtype=jnp.float32)
    weight = jax.random.normal(keys[1], (out_f, in_f), dtype=jnp.float32)
    bias = jax.random.normal(keys[2], (out_f,), dtype=jnp.float32)
    # Module inits lora_E to zeros; use nonzero values so the low-rank path is exercised.
    lora_A = 0.02 * jax.random.normal(keys[3], (r, in_f), dtype=jnp.float32)
    lora_B = 0.02 * jax.random.normal(keys[4], (out_f, r), dtype=jnp.float32)
    lora_E = 0.02 * jax.random.normal(keys[5], (r, 1), dtype=jnp.float32)

    ref = _reference_fc(x, weight, bias, lora_A, lora_B, lora_E,
                        lr_multiplier=lr_mult, lora_alpha=lora_alpha, r=r)

    # f32-operand path (exactness check of gains / padding / LoRA math).
    p_f32 = prepare_ada_fc_params(weight, bias, lora_A, lora_B, lora_E,
                                  lr_multiplier=lr_mult, lora_alpha=lora_alpha, r=r,
                                  fold_lora=False, param_dtype=jnp.float32)
    out_f32 = jax.block_until_ready(dense_forward(x, p_f32))
    assert out_f32.shape == (N, out_f)
    assert jnp.allclose(out_f32, ref, atol=2e-3, rtol=2e-3), "f32 low-rank path mismatch"

    # bf16 MXU operands (v6e/v7x native), f32 accumulation.
    p_bf16 = prepare_ada_fc_params(weight, bias, lora_A, lora_B, lora_E,
                                   lr_multiplier=lr_mult, lora_alpha=lora_alpha, r=r,
                                   fold_lora=False, param_dtype=jnp.bfloat16)
    out_bf16 = jax.block_until_ready(dense_forward(x, p_bf16))
    assert out_bf16.shape == (N, out_f)
    assert jnp.allclose(out_bf16, ref, atol=5e-2, rtol=5e-2), "bf16 low-rank path mismatch"

    # Folded effective-weight path (for cached / frozen LoRA inference).
    p_fold = prepare_ada_fc_params(weight, bias, lora_A, lora_B, lora_E,
                                   lr_multiplier=lr_mult, lora_alpha=lora_alpha, r=r,
                                   fold_lora=True, param_dtype=jnp.bfloat16)
    out_fold = jax.block_until_ready(dense_forward(x, p_fold))
    assert out_fold.shape == (N, out_f)
    assert jnp.allclose(out_fold, ref, atol=5e-2, rtol=5e-2), "folded path mismatch"

    # K-tiled path with odd N and K padding (tile_k=128 -> 2 K tiles).
    N2, in2, out2 = 33, 200, 96
    x2 = jax.random.normal(keys[6], (N2, in2), dtype=jnp.float32)
    w2 = jax.random.normal(keys[7], (out2, in2), dtype=jnp.float32)
    b2 = jax.random.normal(keys[8], (out2,), dtype=jnp.float32)
    a2 = 0.02 * jax.random.normal(keys[9], (r, in2), dtype=jnp.float32)
    bB2 = 0.02 * jax.random.normal(keys[10], (out2, r), dtype=jnp.float32)
    e2 = 0.02 * jax.random.normal(keys[11], (r, 1), dtype=jnp.float32)
    ref2 = _reference_fc(x2, w2, b2, a2, bB2, e2,
                         lr_multiplier=lr_mult, lora_alpha=lora_alpha, r=r)
    p2 = prepare_ada_fc_params(w2, b2, a2, bB2, e2, lr_multiplier=lr_mult,
                               lora_alpha=lora_alpha, r=r,
                               param_dtype=jnp.bfloat16, tile_k=128)
    out2_k = jax.block_until_ready(dense_forward(x2, p2))
    assert out2_k.shape == (N2, out2)
    assert jnp.allclose(out2_k, ref2, atol=5e-2, rtol=5e-2), "K-tiled path mismatch"

    # ---- ControlNet zero_conv 1x1 block ----
    xc = jax.random.normal(keys[12], (2, 4, 16, 16), dtype=jnp.float32)
    wc = 0.25 * jax.random.normal(keys[13], (4, 4, 1, 1), dtype=jnp.float32)
    bc = jax.random.normal(keys[14], (4,), dtype=jnp.float32)
    refc = _reference_zero_conv(xc, wc, bc)
    pc = prepare_zero_conv_params(wc, bc, param_dtype=jnp.bfloat16)
    outc = jax.block_until_ready(zero_conv1x1(xc, pc))
    assert outc.shape == (2, 4, 16, 16)
    assert jnp.allclose(outc, refc, atol=5e-2, rtol=5e-2), "zero_conv1x1 mismatch"

    print("KERNEL_OK")
</pallas_src>

<mosaic_0001>
module attributes {stable_mosaic.version = 11 : i64} {
  func.func @_dense_lora_kernel(%arg0: i32, %arg1: i32, %arg2: i32, %arg3: memref<8x32xf32, #tpu.memory_space<vmem>>, %arg4: memref<32x128xf32, #tpu.memory_space<vmem>>, %arg5: memref<1x128xf32, #tpu.memory_space<vmem>>, %arg6: memref<32x4xf32, #tpu.memory_space<vmem>>, %arg7: memref<4x128xf32, #tpu.memory_space<vmem>>, %arg8: memref<8x128xf32, #tpu.memory_space<vmem>>, %arg9: memref<8x128xf32, #tpu.memory_space<vmem>>, %arg10: memref<8x4xf32, #tpu.memory_space<vmem>>) attributes {dimension_semantics = [#tpu.dimension_semantics<parallel>, #tpu.dimension_semantics<parallel>, #tpu.dimension_semantics<arbitrary>], iteration_bounds = array<i64: 1, 1, 1>, scalar_prefetch = 0 : i64, scratch_operands = 2 : i64, tpu.core_type = #tpu.core_type<tc>, window_params = [{transform_indices = @transform_0, window_bounds = array<i64: 8, 32>}, {transform_indices = @transform_1, window_bounds = array<i64: 32, 128>}, {transform_indices = @transform_2, window_bounds = array<i64: 1, 128>}, {transform_indices = @transform_3, window_bounds = array<i64: 32, 4>}, {transform_indices = @transform_4, window_bounds = array<i64: 4, 128>}, {transform_indices = @transform_5, window_bounds = array<i64: 8, 128>}]} {
    %c0_i32 = arith.constant 0 : i32
    %0 = arith.cmpi eq, %arg2, %c0_i32 : i32
    %1 = arith.extui %0 : i1 to i32
    %c0_i32_0 = arith.constant 0 : i32
    %2 = arith.cmpi ne, %1, %c0_i32_0 : i32
    scf.if %2 {
      %cst_17 = arith.constant 0.000000e+00 : f32
      %17 = vector.broadcast %cst_17 : f32 to vector<8x128xf32>
      %c0_18 = arith.constant 0 : index
      %c0_19 = arith.constant 0 : index
      %18 = vector.load %arg9[%c0_18, %c0_19] : memref<8x128xf32, #tpu.memory_space<vmem>>, vector<8x128xf32>
      tpu.vector_store %arg9[%c0_18, %c0_19], %17 {strides = array<i32>} : memref<8x128xf32, #tpu.memory_space<vmem>>, vector<8x128xf32>,
      %cst_20 = arith.constant 0.000000e+00 : f32
      %19 = vector.broadcast %cst_20 : f32 to vector<8x4xf32>
      %c0_21 = arith.constant 0 : index
      %c0_22 = arith.constant 0 : index
      %20 = vector.load %arg10[%c0_21, %c0_22] : memref<8x4xf32, #tpu.memory_space<vmem>>, vector<8x4xf32>
      tpu.vector_store %arg10[%c0_21, %c0_22], %19 {strides = array<i32>} : memref<8x4xf32, #tpu.memory_space<vmem>>, vector<8x4xf32>,
    } else {
    }
    %c0 = arith.constant 0 : index
    %c0_1 = arith.constant 0 : index
    %3 = vector.load %arg3[%c0, %c0_1] : memref<8x32xf32, #tpu.memory_space<vmem>>, vector<8x32xf32>
    %c0_2 = arith.constant 0 : index
    %c0_3 = arith.constant 0 : index
    %4 = vector.load %arg9[%c0_2, %c0_3] : memref<8x128xf32, #tpu.memory_space<vmem>>, vector<8x128xf32>
    %c0_4 = arith.constant 0 : index
    %c0_5 = arith.constant 0 : index
    %5 = vector.load %arg4[%c0_4, %c0_5] : memref<32x128xf32, #tpu.memory_space<vmem>>, vector<32x128xf32>
    %cst = arith.constant dense<0.000000e+00> : vector<8x128xf32>
    %6 = tpu.matmul %3, %5, %cst {dimension_numbers = #tpu.dot_dimension_numbers<[1], [0], [0], [1], [0, 0, 1, 1], [], []>} : vector<8x32xf32>, vector<32x128xf32>, vector<8x128xf32> -> vector<8x128xf32>
    %7 = arith.addf %4, %6 : vector<8x128xf32>
    %c0_6 = arith.constant 0 : index
    %c0_7 = arith.constant 0 : index
    %8 = vector.load %arg9[%c0_6, %c0_7] : memref<8x128xf32, #tpu.memory_space<vmem>>, vector<8x128xf32>
    tpu.vector_store %arg9[%c0_6, %c0_7], %7 {strides = array<i32>} : memref<8x128xf32, #tpu.memory_space<vmem>>, vector<8x128xf32>,
    %c0_8 = arith.constant 0 : index
    %c0_9 = arith.constant 0 : index
    %9 = vector.load %arg10[%c0_8, %c0_9] : memref<8x4xf32, #tpu.memory_space<vmem>>, vector<8x4xf32>
    %c0_10 = arith.constant 0 : index
    %c0_11 = arith.constant 0 : index
    %10 = vector.load %arg6[%c0_10, %c0_11] : memref<32x4xf32, #tpu.memory_space<vmem>>, vector<32x4xf32>
    %cst_12 = arith.constant dense<0.000000e+00> : vector<8x4xf32>
    %11 = tpu.matmul %3, %10, %cst_12 {dimension_numbers = #tpu.dot_dimension_numbers<[1], [0], [0], [1], [0, 0, 1, 1], [], []>} : vector<8x32xf32>, vector<32x4xf32>, vector<8x4xf32> -> vector<8x4xf32>
    %12 = arith.addf %9, %11 : vector<8x4xf32>
    %c0_13 = arith.constant 0 : index
    %c0_14 = arith.constant 0 : index
    %13 = vector.load %arg10[%c0_13, %c0_14] : memref<8x4xf32, #tpu.memory_space<vmem>>, vector<8x4xf32>
    tpu.vector_store %arg10[%c0_13, %c0_14], %12 {strides = array<i32>} : memref<8x4xf32, #tpu.memory_space<vmem>>, vector<8x4xf32>,
    %c0_i32_15 = arith.constant 0 : i32
    %14 = arith.cmpi eq, %arg2, %c0_i32_15 : i32
    %15 = arith.extui %14 : i1 to i32
    %c0_i32_16 = arith.constant 0 : i32
    %16 = arith.cmpi ne, %15, %c0_i32_16 : i32
    scf.if %16 {
      %c0_17 = arith.constant 0 : index
      %c0_18 = arith.constant 0 : index
      %17 = vector.load %arg10[%c0_17, %c0_18] : memref<8x4xf32, #tpu.memory_space<vmem>>, vector<8x4xf32>
      %c0_19 = arith.constant 0 : index
      %c0_20 = arith.constant 0 : index
      %18 = vector.load %arg7[%c0_19, %c0_20] : memref<4x128xf32, #tpu.memory_space<vmem>>, vector<4x128xf32>
      %cst_21 = arith.constant dense<0.000000e+00> : vector<8x128xf32>
      %19 = tpu.matmul %17, %18, %cst_21 {dimension_numbers = #tpu.dot_dimension_numbers<[1], [0], [0], [1], [0, 0, 1, 1], [], []>} : vector<8x4xf32>, vector<4x128xf32>, vector<8x128xf32> -> vector<8x128xf32>
      %c0_22 = arith.constant 0 : index
      %c0_23 = arith.constant 0 : index
      %20 = vector.load %arg9[%c0_22, %c0_23] : memref<8x128xf32, #tpu.memory_space<vmem>>, vector<8x128xf32>
      %cst_24 = arith.constant 0.176776692 : f32
      %21 = vector.broadcast %cst_24 : f32 to vector<8x128xf32>
      %22 = arith.mulf %20, %21 : vector<8x128xf32>
      %c0_25 = arith.constant 0 : index
      %c0_26 = arith.constant 0 : index
      %23 = vector.load %arg5[%c0_25, %c0_26] : memref<1x128xf32, #tpu.memory_space<vmem>>, vector<1x128xf32>
      %24 = vector.broadcast %23 : vector<1x128xf32> to vector<8x128xf32>
      %25 = arith.addf %22, %24 : vector<8x128xf32>
      %26 = arith.addf %25, %19 : vector<8x128xf32>
      %c0_27 = arith.constant 0 : index
      %c0_28 = arith.constant 0 : index
      %27 = vector.load %arg8[%c0_27, %c0_28] : memref<8x128xf32, #tpu.memory_space<vmem>>, vector<8x128xf32>
      tpu.vector_store %arg8[%c0_27, %c0_28], %26 {strides = array<i32>} : memref<8x128xf32, #tpu.memory_space<vmem>>, vector<8x128xf32>,
    } else {
    }
    return
  }
  func.func @transform_0(%arg0: i32, %arg1: i32, %arg2: i32) -> (i32, i32) {
    %c0_i32 = arith.constant 0 : i32
    return %arg0, %arg2 : i32, i32
  }
  func.func @transform_1(%arg0: i32, %arg1: i32, %arg2: i32) -> (i32, i32) {
    %c0_i32 = arith.constant 0 : i32
    return %arg2, %arg1 : i32, i32
  }
  func.func @transform_2(%arg0: i32, %arg1: i32, %arg2: i32) -> (i32, i32) {
    %c0_i32 = arith.constant 0 : i32
    %c0_i32_0 = arith.constant 0 : i32
    return %c0_i32, %arg1 : i32, i32
  }
  func.func @transform_3(%arg0: i32, %arg1: i32, %arg2: i32) -> (i32, i32) {
    %c0_i32 = arith.constant 0 : i32
    %c0_i32_0 = arith.constant 0 : i32
    return %arg2, %c0_i32 : i32, i32
  }
  func.func @transform_4(%arg0: i32, %arg1: i32, %arg2: i32) -> (i32, i32) {
    %c0_i32 = arith.constant 0 : i32
    %c0_i32_0 = arith.constant 0 : i32
    return %c0_i32, %arg1 : i32, i32
  }
  func.func @transform_5(%arg0: i32, %arg1: i32, %arg2: i32) -> (i32, i32) {
    %c0_i32 = arith.constant 0 : i32
    return %arg0, %arg1 : i32, i32
  }
}

</mosaic_0001>

<llo_original>
// kernel: tpu_custom_call.1
$region0: #{tpu_custom_call.1}
  #allocation0 [shape = 'u32[]', space=smem, size = 0x4, offset = 0x4, fixed_abs, tag = 'smem constant byte address 0x4 - core index']
  #allocation1 [shape = 'u32[144,128]{1,0:T(1,128)}', space=vmem, size = 0x12000, scoped, tag = 'internal scratch']
  #allocation2 [shape = 'f32[8,128]{1,0:T(8,128)}', space=vmem, size = 0x1000, scoped, tag = 'scratch operand']
  #allocation3 [shape = 'f32[8,4]{1,0:T(8,128)}', space=vmem, size = 0x1000, scoped, tag = 'scratch operand']
  %s0 = inlined_call_operand.hbm [shape: f32[8,32], index: 0, kind: input, shape index: {}]
  %s1 = inlined_call_operand.vmem [shape: f32[32,128], index: 1, kind: input, shape index: {}]
  %s2 = inlined_call_operand.vmem [shape: f32[1,128], index: 2, kind: input, shape index: {}]
  %s3 = inlined_call_operand.vmem [shape: f32[32,4], index: 3, kind: input, shape index: {}]
  %s4 = inlined_call_operand.vmem [shape: f32[4,128], index: 4, kind: input, shape index: {}]
  %s5 = inlined_call_operand.hbm [shape: f32[8,128], index: 5, kind: output, shape index: {}]
  %s6 = sld [smem:[#allocation0]]
  $region42: #{tpu_custom_call.1} parent=0
    _
  %s8 = ssub.s32 1, %s6
  %s9 = scalar_select 0, %s8, %s6
  $region1: #{tpu_custom_call.1} parent=0
    #allocation4 [shape = 'u8[4096]{0}', space=vmem, size = 0x1000, scoped, tag = 'input window, operand 0, single buffered']
    #allocation5 [shape = 's32[1]{0}', space=sflag, size = 0x4, scoped, tag = 'scoped memory for tpu_custom_call.1']
    #allocation6 [shape = 's32[1]{0}', space=sflag, size = 0x4, scoped, tag = 'scoped memory for tpu_custom_call.1']
    #allocation7 [shape = 'u8[4096]{0}', space=vmem, size = 0x1000, scoped, tag = 'output window, operand 0, single buffered']
    %10 = vsyncpa [#allocation5], 0
    %11 = vsyncpa [#allocation6], 0
    // Predicated region
    $region2: #{tpu_custom_call.1} parent=1 // pred_check
      _
    $region3: #{tpu_custom_call.1} parent=1 // pred_check_branch
      %13 = sbr.rel (0) target = $region5
    $region4: #{tpu_custom_call.1} parent=1 // pred_region
      %s15 = ssub.s32 128, 128
      %16 = vsyncadd [#allocation5], %s15
      %s18 = sshll.u32 [#allocation4], 4
      %s19 = int_to_ptr.vmem [resolvable:$true] %s18
      %21 = dma.hbm_to_vmem [thread:$0]  %s0, 128, %s19, [#allocation5]
    $region5: #{tpu_custom_call.1} parent=1 // pred_fallthru
      _
    // Predicated region
    $region6: #{tpu_custom_call.1} parent=1 // pred_check
      _
    $region7: #{tpu_custom_call.1} parent=1 // pred_check_branch
      %23 = sbr.rel (0) target = $region9
    $region8: #{tpu_custom_call.1} parent=1 // pred_region
      _
    $region9: #{tpu_custom_call.1} parent=1 // pred_fallthru
      _
    // Predicated region
    $region10: #{tpu_custom_call.1} parent=1 // pred_check
      _
    $region11: #{tpu_custom_call.1} parent=1 // pred_check_branch
      %25 = sbr.rel (0) target = $region13
    $region12: #{tpu_custom_call.1} parent=1 // pred_region
      _
    $region13: #{tpu_custom_call.1} parent=1 // pred_fallthru
      _
    // Predicated region
    $region14: #{tpu_custom_call.1} parent=1 // pred_check
      _
    $region15: #{tpu_custom_call.1} parent=1 // pred_check_branch
      %27 = sbr.rel (0) target = $region17
    $region16: #{tpu_custom_call.1} parent=1 // pred_region
      _
    $region17: #{tpu_custom_call.1} parent=1 // pred_fallthru
      _
    // Predicated region
    $region18: #{tpu_custom_call.1} parent=1 // pred_check
      _
    $region19: #{tpu_custom_call.1} parent=1 // pred_check_branch
      %29 = sbr.rel (0) target = $region21
    $region20: #{tpu_custom_call.1} parent=1 // pred_region
      _
    $region21: #{tpu_custom_call.1} parent=1 // pred_fallthru
      _
    // Predicated region
    $region22: #{tpu_custom_call.1} parent=1 // pred_check
      _
    $region23: #{tpu_custom_call.1} parent=1 // pred_check_branch
      %31 = sbr.rel (0) target = $region25
    $region24: #{tpu_custom_call.1} parent=1 // pred_region
      %32 = dma.done [#allocation5], 128
    $region25: #{tpu_custom_call.1} parent=1 // pred_fallthru
      _
    %p33 = scmp.eq.s32.totalorder 0, 0
    // Predicated region
    $region26: #{tpu_custom_call.1} parent=1 // pred_check
      %p34 = pneg %p33
    $region27: #{tpu_custom_call.1} parent=1 // pred_check_branch
      %36 = sbr.rel (%p34) target = $region29
    $region28: #{tpu_custom_call.1} parent=1 // pred_region
      %37 = vst [vmem:[#allocation2] sm:$0xff] 0.0
      %vm38 = vcmask 31744
      %39 = vst.msk [vmem:[#allocation3] sm:$0xff] %vm38, 0.0
    $region29: #{tpu_custom_call.1} parent=1 // pred_fallthru
      _
    %v40 = vld [vmem:[#allocation4] sm:$0xff]
    %v41 = vld [vmem:[#allocation2] sm:$0xff]
    %v42 = vld [vmem:[%s1] sm:$0xff]
    %v43 = vld [vmem:[%s1 + $0x8] sm:$0xff]
    %v44 = vld [vmem:[%s1 + $0x10] sm:$0xff]
    %v45 = vld [vmem:[%s1 + $0x18] sm:$0xff]
    %vm46 = vcmask 261120
    %v48 = vsel %vm46, %v40, 0
    %50 = vmatprep.subr.mxu0 0.0
    %51 = vmatpush1.msra.mxu0 0.0
    %52 = vmatprep.subr.mxu0 0.0
    %53 = vmatpush1.msra.mxu0 0.0
    %54 = vmatprep.subr.mxu0 0.0
    %55 = vmatpush1.msra.mxu0 0.0
    %56 = vmatprep.subr.mxu0 0.0
    %57 = vmatpush1.msra.mxu0 0.0
    %58 = vmatprep.subr.mxu0 0.0
    %59 = vmatpush1.msra.mxu0 0.0
    %60 = vmatprep.subr.mxu0 0.0
    %61 = vmatpush1.msra.mxu0 0.0
    %62 = vmatprep.subr.mxu0 0.0
    %63 = vmatpush1.msra.mxu0 0.0
    %64 = vmatprep.subr.mxu0 0.0
    %65 = vmatpush1.msra.mxu0 0.0
    %66 = vmatprep.subr.mxu0 0.0
    %67 = vmatpush1.msra.mxu0 0.0
    %68 = vmatprep.subr.mxu0 0.0
    %69 = vmatpush1.msra.mxu0 0.0
    %70 = vmatprep.subr.mxu0 0.0
    %71 = vmatpush1.msra.mxu0 0.0
    %72 = vmatprep.subr.mxu0 0.0
    %73 = vmatpush1.msra.mxu0 0.0
    %74 = vmatprep.subr.mxu0 0.0
    %75 = vmatpush1.msra.mxu0 %v45
    %76 = vmatprep.subr.mxu0 0.0
    %77 = vmatpush1.msra.mxu0 %v44
    %78 = vmatprep.subr.mxu0 0.0
    %79 = vmatpush1.msra.mxu0 %v43
    %80 = vmatprep.subr.mxu0 0.0
    %81 = vmatpush1.msra.mxu0 %v42
    %82 = vmatprep.subr.mxu0 0.0
    %83 = vmatpush2.msra.mxu0 0.0
    %84 = vmatprep.subr.mxu0 0.0
    %85 = vmatpush2.msra.mxu0 0.0
    %86 = vmatprep.subr.mxu0 0.0
    %87 = vmatpush2.msra.mxu0 0.0
    %88 = vmatprep.subr.mxu0 0.0
    %89 = vmatpush2.msra.mxu0 0.0
    %90 = vmatprep.subr.mxu0 0.0
    %91 = vmatpush2.msra.mxu0 0.0
    %92 = vmatprep.subr.mxu0 0.0
    %93 = vmatpush2.msra.mxu0 0.0
    %94 = vmatprep.subr.mxu0 0.0
    %95 = vmatpush2.msra.mxu0 0.0
    %96 = vmatprep.subr.mxu0 0.0
    %97 = vmatpush2.msra.mxu0 0.0
    %98 = vmatprep.subr.mxu0 0.0
    %99 = vmatpush2.msra.mxu0 0.0
    %100 = vmatprep.subr.mxu0 0.0
    %101 = vmatpush2.msra.mxu0 0.0
    %102 = vmatprep.subr.mxu0 0.0
    %103 = vmatpush2.msra.mxu0 0.0
    %104 = vmatprep.subr.mxu0 0.0
    %105 = vmatpush2.msra.mxu0 0.0
    %106 = vmatprep.subr.mxu0 0.0
    %107 = vmatpush2.msra.mxu0 0.0
    %108 = vmatprep.subr.mxu0 0.0
    %109 = vmatpush2.msra.mxu0 0.0
    %110 = vmatprep.subr.mxu0 0.0
    %111 = vmatpush2.msra.mxu0 0.0
    %112 = vmatprep.subr.mxu0 0.0
    %113 = vmatpush2.msra.mxu0 0.0
    %114 = vmatprep.mubr.f32.mxu0 0.0
    %115 = vmatmul.mubr.f32.gmra.mxu0 %v48
    %v116 = vpop.f32.mrf.mxu0
    %v117 = vadd.f32 0.0, %v116
    %v118 = vpop.f32.mrf.mxu0
    %119 = vdwg.mxu0
    %v120 = vadd.f32 %v41, %v117
    %121 = vst [vmem:[#allocation2] sm:$0xff] %v120
    %v122 = vld [vmem:[#allocation3] sm:$0xff]
    %v123 = vld [vmem:[%s3] sm:$0xff]
    %v124 = vld [vmem:[%s3 + $0x8] sm:$0xff]
    %v125 = vld [vmem:[%s3 + $0x10] sm:$0xff]
    %v126 = vld [vmem:[%s3 + $0x18] sm:$0xff]
    %127 = vmatprep.subr.mxu0 0.0
    %128 = vmatpush1.msra.mxu0 0.0
    %129 = vmatprep.subr.mxu0 0.0
    %130 = vmatpush1.msra.mxu0 0.0
    %131 = vmatprep.subr.mxu0 0.0
    %132 = vmatpush1.msra.mxu0 0.0
    %133 = vmatprep.subr.mxu0 0.0
    %134 = vmatpush1.msra.mxu0 0.0
    %135 = vmatprep.subr.mxu0 0.0
    %136 = vmatpush1.msra.mxu0 0.0
    %137 = vmatprep.subr.mxu0 0.0
    %138 = vmatpush1.msra.mxu0 0.0
    %139 = vmatprep.subr.mxu0 0.0
    %140 = vmatpush1.msra.mxu0 0.0
    %141 = vmatprep.subr.mxu0 0.0
    %142 = vmatpush1.msra.mxu0 0.0
    %143 = vmatprep.subr.mxu0 0.0
    %144 = vmatpush1.msra.mxu0 0.0
    %145 = vmatprep.subr.mxu0 0.0
    %146 = vmatpush1.msra.mxu0 0.0
    %147 = vmatprep.subr.mxu0 0.0
    %148 = vmatpush1.msra.mxu0 0.0
    %149 = vmatprep.subr.mxu0 0.0
    %150 = vmatpush1.msra.mxu0 0.0
    %151 = vmatprep.subr.mxu0 0.0
    %152 = vmatpush1.msra.mxu0 %v126
    %153 = vmatprep.subr.mxu0 0.0
    %154 = vmatpush1.msra.mxu0 %v125
    %155 = vmatprep.subr.mxu0 0.0
    %156 = vmatpush1.msra.mxu0 %v124
    %157 = vmatprep.subr.mxu0 0.0
    %158 = vmatpush1.msra.mxu0 %v123
    %159 = vmatprep.subr.mxu0 0.0
    %160 = vmatpush2.msra.mxu0 0.0
    %161 = vmatprep.subr.mxu0 0.0
    %162 = vmatpush2.msra.mxu0 0.0
    %163 = vmatprep.subr.mxu0 0.0
    %164 = vmatpush2.msra.mxu0 0.0
    %165 = vmatprep.subr.mxu0 0.0
    %166 = vmatpush2.msra.mxu0 0.0
    %167 = vmatprep.subr.mxu0 0.0
    %168 = vmatpush2.msra.mxu0 0.0
    %169 = vmatprep.subr.mxu0 0.0
    %170 = vmatpush2.msra.mxu0 0.0
    %171 = vmatprep.subr.mxu0 0.0
    %172 = vmatpush2.msra.mxu0 0.0
    %173 = vmatprep.subr.mxu0 0.0
    %174 = vmatpush2.msra.mxu0 0.0
    %175 = vmatprep.subr.mxu0 0.0
    %176 = vmatpush2.msra.mxu0 0.0
    %177 = vmatprep.subr.mxu0 0.0
    %178 = vmatpush2.msra.mxu0 0.0
    %179 = vmatprep.subr.mxu0 0.0
    %180 = vmatpush2.msra.mxu0 0.0
    %181 = vmatprep.subr.mxu0 0.0
    %182 = vmatpush2.msra.mxu0 0.0
    %183 = vmatprep.subr.mxu0 0.0
    %184 = vmatpush2.msra.mxu0 0.0
    %185 = vmatprep.subr.mxu0 0.0
    %186 = vmatpush2.msra.mxu0 0.0
    %187 = vmatprep.subr.mxu0 0.0
    %188 = vmatpush2.msra.mxu0 0.0
    %189 = vmatprep.subr.mxu0 0.0
    %190 = vmatpush2.msra.mxu0 0.0
    %191 = vmatprep.mubr.f32.mxu0 0.0
    %192 = vmatmul.mubr.f32.gmra.mxu0 %v48
    %v193 = vpop.f32.mrf.mxu0
    %v194 = vadd.f32 0.0, %v193
    %v195 = vpop.f32.mrf.mxu0
    %196 = vdwg.mxu0
    %v197 = vadd.f32 %v122, %v194
    %vm198 = vcmask 31744
    %199 = vst.msk [vmem:[#allocation3] sm:$0xff] %vm198, %v197
    // Predicated region
    $region30: #{tpu_custom_call.1} parent=1 // pred_check
      %p200 = pneg %p33
    $region31: #{tpu_custom_call.1} parent=1 // pred_check_branch
      %202 = sbr.rel (%p200) target = $region33
    $region32: #{tpu_custom_call.1} parent=1 // pred_region
      %v203 = vld [vmem:[#allocation3] sm:$0xff]
      %v204 = vld [vmem:[%s4] sm:$0xf]
      %v206 = vsel %vm198, %v203, 0
      %vm208 = vcmask 1043456
      %v210 = vsel %vm208, %v204, 0
      %212 = vmatprep.subr.mxu0 0.0
      %213 = vmatpush1.msra.mxu0 0.0
      %214 = vmatprep.subr.mxu0 0.0
      %215 = vmatpush1.msra.mxu0 0.0
      %216 = vmatprep.subr.mxu0 0.0
      %217 = vmatpush1.msra.mxu0 0.0
      %218 = vmatprep.subr.mxu0 0.0
      %219 = vmatpush1.msra.mxu0 0.0
      %220 = vmatprep.subr.mxu0 0.0
      %221 = vmatpush1.msra.mxu0 0.0
      %222 = vmatprep.subr.mxu0 0.0
      %223 = vmatpush1.msra.mxu0 0.0
      %224 = vmatprep.subr.mxu0 0.0
      %225 = vmatpush1.msra.mxu0 0.0
      %226 = vmatprep.subr.mxu0 0.0
      %227 = vmatpush1.msra.mxu0 0.0
      %228 = vmatprep.subr.mxu0 0.0
      %229 = vmatpush1.msra.mxu0 0.0
      %230 = vmatprep.subr.mxu0 0.0
      %231 = vmatpush1.msra.mxu0 0.0
      %232 = vmatprep.subr.mxu0 0.0
      %233 = vmatpush1.msra.mxu0 0.0
      %234 = vmatprep.subr.mxu0 0.0
      %235 = vmatpush1.msra.mxu0 0.0
      %236 = vmatprep.subr.mxu0 0.0
      %237 = vmatpush1.msra.mxu0 0.0
      %238 = vmatprep.subr.mxu0 0.0
      %239 = vmatpush1.msra.mxu0 0.0
      %240 = vmatprep.subr.mxu0 0.0
      %241 = vmatpush1.msra.mxu0 0.0
      %242 = vmatprep.subr.mxu0 0.0
      %243 = vmatpush1.msra.mxu0 %v210
      %244 = vmatprep.subr.mxu0 0.0
      %245 = vmatpush2.msra.mxu0 0.0
      %246 = vmatprep.subr.mxu0 0.0
      %247 = vmatpush2.msra.mxu0 0.0
      %248 = vmatprep.subr.mxu0 0.0
      %249 = vmatpush2.msra.mxu0 0.0
      %250 = vmatprep.subr.mxu0 0.0
      %251 = vmatpush2.msra.mxu0 0.0
      %252 = vmatprep.subr.mxu0 0.0
      %253 = vmatpush2.msra.mxu0 0.0
      %254 = vmatprep.subr.mxu0 0.0
      %255 = vmatpush2.msra.mxu0 0.0
      %256 = vmatprep.subr.mxu0 0.0
      %257 = vmatpush2.msra.mxu0 0.0
      %258 = vmatprep.subr.mxu0 0.0
      %259 = vmatpush2.msra.mxu0 0.0
      %260 = vmatprep.subr.mxu0 0.0
      %261 = vmatpush2.msra.mxu0 0.0
      %262 = vmatprep.subr.mxu0 0.0
      %263 = vmatpush2.msra.mxu0 0.0
      %264 = vmatprep.subr.mxu0 0.0
      %265 = vmatpush2.msra.mxu0 0.0
      %266 = vmatprep.subr.mxu0 0.0
      %267 = vmatpush2.msra.mxu0 0.0
      %268 = vmatprep.subr.mxu0 0.0
      %269 = vmatpush2.msra.mxu0 0.0
      %270 = vmatprep.subr.mxu0 0.0
      %271 = vmatpush2.msra.mxu0 0.0
      %272 = vmatprep.subr.mxu0 0.0
      %273 = vmatpush2.msra.mxu0 0.0
      %274 = vmatprep.subr.mxu0 0.0
      %275 = vmatpush2.msra.mxu0 0.0
      %276 = vmatprep.mubr.f32.mxu0 0.0
      %277 = vmatmul.mubr.f32.gmra.mxu0 %v206
      %v278 = vpop.f32.mrf.mxu0
      %v279 = vadd.f32 0.0, %v278
      %v280 = vpop.f32.mrf.mxu0
      %281 = vdwg.mxu0
      %v282 = vld [vmem:[#allocation2] sm:$0xff]
      %v283 = vmul.f32 %v282, 0.17677669
      %v284 = vld [vmem:[%s2] sm:$0x1]
      %v286 = vlaneseq
      %v287 = vshrl.u32 %v286, 7
      %v288 = vsub.s32 0, %v287
      %v289 = vrot.slane %v284, %v288
      %v291 = vadd.f32 %v283, %v289
      %v292 = vadd.f32 %v291, %v279
      %293 = vst [vmem:[#allocation7] sm:$0xff] %v292
    $region33: #{tpu_custom_call.1} parent=1 // pred_fallthru
      _
    // Predicated region
    $region34: #{tpu_custom_call.1} parent=1 // pred_check
      _
    $region35: #{tpu_custom_call.1} parent=1 // pred_check_branch
      %295 = sbr.rel (0) target = $region37
    $region36: #{tpu_custom_call.1} parent=1 // pred_region
      %s297 = ssub.s32 128, 128
      %298 = vsyncadd [#allocation6], %s297
      %s300 = sshll.u32 [#allocation7], 4
      %s301 = int_to_ptr.vmem [resolvable:$true] %s300
      %303 = dma.vmem_to_hbm [thread:$0]  %s301, 128, %s5, [#allocation6]
    $region37: #{tpu_custom_call.1} parent=1 // pred_fallthru
      _
    // Predicated region
    $region38: #{tpu_custom_call.1} parent=1 // pred_check
      _
    $region39: #{tpu_custom_call.1} parent=1 // pred_check_branch
      %305 = sbr.rel (0) target = $region41
    $region40: #{tpu_custom_call.1} parent=1 // pred_region
      %306 = dma.done [#allocation6], 128
    $region41: #{tpu_custom_call.1} parent=1 // pred_fallthru
      _
    %307 = vsyncpa [#allocation5], 1
    %308 = vsyncpa [#allocation6], 1

</llo_original>
